<compile_context>
chip_gen: v5e
topology: v5e:2x2
jax: 0.10.0
libtpu: 0.0.40
codegen_flags: <defaults>
</compile_context>

<pallas_src>
import jax
import jax.numpy as jnp
from jax import lax
from jax.experimental import pallas as pl
from jax.experimental.pallas import tpu as pltpu


# ----------------------------- Pallas kernel -----------------------------
def _mm_bias_kernel(x_ref, w_ref, b_ref, o_ref):
    # x: (rt, K) bf16   w: (K, Co) bf16   b: (1, Co) f32   o: (rt, Co) f32
    o_ref[...] = (
        jnp.dot(x_ref[...], w_ref[...], preferred_element_type=jnp.float32)
        + b_ref[...]
    )


def _matmul_bias(x, w, b, *, row_tile=256):
    """(R, K) @ (K, Co) + b, tiled over rows, bf16 MXU inputs, f32 accumulate."""
    R, K = x.shape
    Co = w.shape[1]

    rt = min(row_tile, R)
    rt = max(8, (rt // 8) * 8)
    Rp = pl.cdiv(R, rt) * rt
    if Rp != R:
        x = jnp.pad(x, ((0, Rp - R), (0, 0)))

    out = pl.pallas_call(
        _mm_bias_kernel,
        out_shape=jax.ShapeDtypeStruct((Rp, Co), jnp.float32),
        grid=(Rp // rt,),
        in_specs=[
            pl.BlockSpec((rt, K), lambda r: (r, 0)),
            pl.BlockSpec((K, Co), lambda r: (0, 0)),
            pl.BlockSpec((1, Co), lambda r: (0, 0)),
        ],
        out_specs=pl.BlockSpec((rt, Co), lambda r: (r, 0)),
        compiler_params=pltpu.CompilerParams(dimension_semantics=("parallel",)),
    )(x.astype(jnp.bfloat16), w.astype(jnp.bfloat16), b.reshape(1, Co).astype(jnp.float32))
    return out[:R]


# ----------------------------- JAX glue (pure data movement) -----------------------------
def _pixel_shuffle_nhwc(y, r):
    # PyTorch pixel_shuffle: out[n, c, h*r+i, w*r+j] = in[n, c*r*r + i*r + j, h, w]
    N, H, W, C = y.shape
    Co = C // (r * r)
    y = y.reshape(N, H, W, Co, r, r)
    y = jnp.transpose(y, (0, 1, 4, 2, 5, 3))  # N, H, i, W, j, Co
    return y.reshape(N, H * r, W * r, Co)


def _up1d_bilinear2(a, axis):
    # PyTorch interpolate(scale_factor=2, mode='bilinear', align_corners=False) along one axis:
    #   out[2i]   = 0.25*a[max(i-1,0)] + 0.75*a[i]
    #   out[2i+1] = 0.75*a[i]          + 0.25*a[min(i+1,L-1)]
    L = a.shape[axis]
    idx = jnp.arange(L)
    a_prev = jnp.take(a, jnp.clip(idx - 1, 0, L - 1), axis=axis)
    a_next = jnp.take(a, jnp.clip(idx + 1, 0, L - 1), axis=axis)
    even = 0.75 * a + 0.25 * a_prev
    odd = 0.75 * a + 0.25 * a_next
    out = jnp.stack([even, odd], axis=axis + 1)
    new_shape = list(a.shape)
    new_shape[axis] = 2 * L
    return out.reshape(new_shape)


def _bilinear_up2_nhwc(x):
    x = _up1d_bilinear2(x, axis=1)  # H
    x = _up1d_bilinear2(x, axis=2)  # W
    return x


def _im2col_3x3(x):
    # x: (N, H, W, C) -> (N*H*W, 9*C), "same" padding (pad=1), tap order (kh, kw, cin)
    N, H, W, C = x.shape
    xp = jnp.pad(x, ((0, 0), (1, 1), (1, 1), (0, 0)))
    cols = [xp[:, dy:dy + H, dx:dx + W, :] for dy in range(3) for dx in range(3)]
    p = jnp.stack(cols, axis=3)  # (N, H, W, 9, C)
    return p.reshape(N * H * W, 9 * C)


# ----------------------------- Module forward (Pallas path) -----------------------------
def upsample_forward(x_nchw, params, *, subpixel=True):
    N, Cin, H, W = x_nchw.shape
    x = jnp.transpose(x_nchw, (0, 2, 3, 1))  # NHWC

    if subpixel:
        # conv 1x1 -> 4*Cout (lane-dense 128-wide output slab), then pixel_shuffle(2)
        w = params["w"]                                   # (1, 1, Cin, 4*Cout) HWIO
        C4 = w.shape[-1]
        y = _matmul_bias(x.reshape(N * H * W, Cin), w.reshape(Cin, C4), params["b"],
                         row_tile=256)
        y = _pixel_shuffle_nhwc(y.reshape(N, H, W, C4), 2)       # (N, 2H, 2W, Cout)
    else:
        # bilinear x2 (align_corners=False) then 3x3 "same" conv
        w = params["w"]                                   # (3, 3, Cin, Cout) HWIO
        Cout = w.shape[-1]
        xu = _bilinear_up2_nhwc(x)                        # (N, 2H, 2W, Cin)
        patches = _im2col_3x3(xu)                         # (N*4HW, 9*Cin)
        # TODO(synk): Cout=32 < 128 lanes here -> masked stores; the lane-dense fix would
        #             need a (Cout, rows) orientation, skipped for this non-default branch.
        y = _matmul_bias(patches, w.reshape(9 * Cin, Cout), params["b"], row_tile=512)
        y = y.reshape(N, 2 * H, 2 * W, Cout)

    return jnp.transpose(y, (0, 3, 1, 2))  # back to PyTorch NCHW


# ----------------------------- Pure-JAX reference -----------------------------
def ref_forward(x_nchw, params, *, subpixel=True):
    x = jnp.transpose(x_nchw, (0, 2, 3, 1))
    if subpixel:
        y = lax.conv_general_dilated(
            x, params["w"], (1, 1), "VALID",
            dimension_numbers=("NHWC", "HWIO", "NHWC"),
            precision=lax.Precision.HIGHEST) + params["b"]
        y = _pixel_shuffle_nhwc(y, 2)
    else:
        xu = _bilinear_up2_nhwc(x)
        y = lax.conv_general_dilated(
            xu, params["w"], (1, 1), "SAME",
            dimension_numbers=("NHWC", "HWIO", "NHWC"),
            precision=lax.Precision.HIGHEST) + params["b"]
    return jnp.transpose(y, (0, 3, 1, 2))


# ----------------------------- Main -----------------------------
if __name__ == "__main__":
    N, Cin, H, W = 2, 32, 16, 16
    Cout = 32

    key = jax.random.PRNGKey(0)
    k_x, k_w1, k_b1, k_w3, k_b3 = jax.random.split(key, 5)

    x_nchw = jax.random.normal(k_x, (N, Cin, H, W), jnp.float32)

    params_sub = {  # subpixel=True: 1x1 conv -> 4*Cout channels
        "w": jax.random.normal(k_w1, (1, 1, Cin, 4 * Cout), jnp.float32) / jnp.sqrt(Cin),
        "b": 0.05 * jax.random.normal(k_b1, (4 * Cout,), jnp.float32),
    }
    params_bil = {  # subpixel=False: 3x3 conv, Cin -> Cout
        "w": jax.random.normal(k_w3, (3, 3, Cin, Cout), jnp.float32) / jnp.sqrt(9 * Cin),
        "b": 0.05 * jax.random.normal(k_b3, (Cout,), jnp.float32),
    }

    y_sub = upsample_forward(x_nchw, params_sub, subpixel=True)
    y_bil = upsample_forward(x_nchw, params_bil, subpixel=False)
    jax.block_until_ready((y_sub, y_bil))

    def _check(a, b, tol=2e-2):
        d = float(jnp.max(jnp.abs(a - b)))
        s = float(jnp.max(jnp.abs(b))) + 1e-6
        assert d / s < tol, (d, s, d / s)

    _check(y_sub, ref_forward(x_nchw, params_sub, subpixel=True))
    _check(y_bil, ref_forward(x_nchw, params_bil, subpixel=False))

    assert y_sub.shape == (N, Cout, 2 * H, 2 * W)
    assert y_bil.shape == (N, Cout, 2 * H, 2 * W)

    print("KERNEL_OK")
</pallas_src>

<mosaic_0001>
module attributes {stable_mosaic.version = 11 : i64} {
  func.func @_mm_bias_kernel(%arg0: i32, %arg1: memref<256x32xbf16, #tpu.memory_space<vmem>>, %arg2: memref<32x128xbf16, #tpu.memory_space<vmem>>, %arg3: memref<1x128xf32, #tpu.memory_space<vmem>>, %arg4: memref<256x128xf32, #tpu.memory_space<vmem>>) attributes {dimension_semantics = [#tpu.dimension_semantics<parallel>], iteration_bounds = array<i64: 2>, scalar_prefetch = 0 : i64, scratch_operands = 0 : i64, tpu.core_type = #tpu.core_type<tc>, window_params = [{transform_indices = @transform_0, window_bounds = array<i64: 256, 32>}, {pipeline_mode = #tpu.pipeline_mode<synchronous>, transform_indices = @transform_1, window_bounds = array<i64: 32, 128>}, {pipeline_mode = #tpu.pipeline_mode<synchronous>, transform_indices = @transform_2, window_bounds = array<i64: 1, 128>}, {transform_indices = @transform_3, window_bounds = array<i64: 256, 128>}]} {
    %c0 = arith.constant 0 : index
    %c0_0 = arith.constant 0 : index
    %0 = vector.load %arg1[%c0, %c0_0] : memref<256x32xbf16, #tpu.memory_space<vmem>>, vector<256x32xbf16>
    %c0_1 = arith.constant 0 : index
    %c0_2 = arith.constant 0 : index
    %1 = vector.load %arg2[%c0_1, %c0_2] : memref<32x128xbf16, #tpu.memory_space<vmem>>, vector<32x128xbf16>
    %cst = arith.constant dense<0.000000e+00> : vector<256x128xf32>
    %2 = tpu.matmul %0, %1, %cst {dimension_numbers = #tpu.dot_dimension_numbers<[1], [0], [0], [1], [0, 0, 1, 1], [], []>} : vector<256x32xbf16>, vector<32x128xbf16>, vector<256x128xf32> -> vector<256x128xf32>
    %c0_3 = arith.constant 0 : index
    %c0_4 = arith.constant 0 : index
    %3 = vector.load %arg3[%c0_3, %c0_4] : memref<1x128xf32, #tpu.memory_space<vmem>>, vector<1x128xf32>
    %4 = vector.broadcast %3 : vector<1x128xf32> to vector<256x128xf32>
    %5 = arith.addf %2, %4 : vector<256x128xf32>
    %c0_5 = arith.constant 0 : index
    %c0_6 = arith.constant 0 : index
    %6 = vector.load %arg4[%c0_5, %c0_6] : memref<256x128xf32, #tpu.memory_space<vmem>>, vector<256x128xf32>
    tpu.vector_store %arg4[%c0_5, %c0_6], %5 {strides = array<i32>} : memref<256x128xf32, #tpu.memory_space<vmem>>, vector<256x128xf32>,
    return
  }
  func.func @transform_0(%arg0: i32) -> (i32, i32) {
    %c0_i32 = arith.constant 0 : i32
    %c0_i32_0 = arith.constant 0 : i32
    return %arg0, %c0_i32 : i32, i32
  }
  func.func @transform_1(%arg0: i32) -> (i32, i32) {
    %c0_i32 = arith.constant 0 : i32
    %c0_i32_0 = arith.constant 0 : i32
    %c0_i32_1 = arith.constant 0 : i32
    return %c0_i32, %c0_i32_0 : i32, i32
  }
  func.func @transform_2(%arg0: i32) -> (i32, i32) {
    %c0_i32 = arith.constant 0 : i32
    %c0_i32_0 = arith.constant 0 : i32
    %c0_i32_1 = arith.constant 0 : i32
    return %c0_i32, %c0_i32_0 : i32, i32
  }
  func.func @transform_3(%arg0: i32) -> (i32, i32) {
    %c0_i32 = arith.constant 0 : i32
    %c0_i32_0 = arith.constant 0 : i32
    return %arg0, %c0_i32 : i32, i32
  }
}

</mosaic_0001>

<llo_original>
// kernel: tpu_custom_call.1
$region0: #{tpu_custom_call.1}
  #allocation0 [shape = 'u32[]', space=smem, size = 0x4, offset = 0x4, fixed_abs, tag = 'smem constant byte address 0x4 - core index']
  #allocation1 [shape = 'u32[72,128]{1,0:T(1,128)}', space=vmem, size = 0x9000, scoped, tag = 'internal scratch']
  %s0 = inlined_call_operand.vmem [shape: bf16[512,32], index: 0, kind: input, shape index: {}]
  %s1 = inlined_call_operand.vmem [shape: bf16[32,128], index: 1, kind: input, shape index: {}]
  %s2 = inlined_call_operand.vmem [shape: f32[1,128], index: 2, kind: input, shape index: {}]
  %s3 = inlined_call_operand.hbm [shape: f32[512,128], index: 3, kind: output, shape index: {}]
  %s4 = sld [smem:[#allocation0]]
  $region45: #{tpu_custom_call.1} parent=0
    _
  %s6 = ssub.s32 1, %s4
  %s7 = scalar_select 0, %s6, %s4
  $region1: #{tpu_custom_call.1} parent=0
    #allocation2 [shape = 'u8[262144]{0}', space=vmem, size = 0x40000, scoped, tag = 'output window, operand 0']
    #allocation3 [shape = 's32[2]{0}', space=sflag, size = 0x8, scoped, tag = 'scoped memory for tpu_custom_call.1']
    %8 = vsyncpa [#allocation3], 0
    %s9 = scalar_lea.sflag [#allocation3], 1
    %10 = vsyncpa %s9, 0
    loop: start=0, step=1, limit=4
    $region2: #{tpu_custom_call.1} parent=1 // loop_pre_header
      _
    $region3: #{tpu_custom_call.1} parent=1 // loop_header
      %s12 = sphi 0, %s16
      %p13 = scmp.ge.s32.totalorder %s12, 4
      %s22 = sphi 0, %s24
      %s25 = sphi 0, %s22
      %s26 = sphi 0, %s25
      %s42 = sphi 0, %s26
      %s46 = sphi 0, %s46
      %s48 = sphi 0, %s46
      %s49 = sphi 0, %s48
      %s63 = sphi 0, %s49
      %s67 = sphi 0, %s67
      %s69 = sphi 0, %s67
      %s70 = sphi 0, %s69
      %s84 = sphi 0, %s70
      %s90 = sphi 0, %s92
      %s93 = sphi 0, %s90
      %s94 = sphi 0, %s93
      %s110 = sphi 0, %s94
    $region4: #{tpu_custom_call.1} parent=1 // loop_header_branch
      %15 = sbr.rel (%p13) target = $region8
    $region5: #{tpu_custom_call.1} parent=1 // loop_body
      %s17 = ssub.s32 %s12, 1
      %s18 = ssub.s32 %s12, 2
      %s19 = sadd.s32 %s12, 1
      %s20 = ssub.s32 %s12, %s19
      %p21 = scmp.eq.s32.totalorder %s20, 0
      %s23 = sadd.s32 %s22, 1
      %s24 = scalar_select %p21, %s22, %s23
      %p27 = pneg %p21
      %p28 = scmp.eq.s32.totalorder %s12, 1
      %p29 = por %p27, %p28
      %p30 = scmp.ne.s32.totalorder %s22, %s25
      %p31 = scmp.eq.s32.totalorder %s12, 0
      %p32 = por %p30, %p31
      %p33 = scmp.ne.s32.totalorder %s22, %s25
      %p34 = scmp.eq.s32.totalorder %s17, 1
      %p35 = por %p33, %p34
      %p36 = scmp.ne.s32.totalorder %s25, %s26
      %p37 = scmp.eq.s32.totalorder %s17, 0
      %p38 = por %p36, %p37
      %p39 = scmp.ne.s32.totalorder %s25, %s26
      %p40 = scmp.eq.s32.totalorder %s18, 1
      %p41 = por %p39, %p40
      %p43 = scmp.ne.s32.totalorder %s26, %s42
      %p44 = scmp.eq.s32.totalorder %s18, 0
      %p45 = por %p43, %p44
      %s47 = sadd.s32 %s46, 1
      %p50 = scmp.eq.s32.totalorder %s12, 1
      %p51 = scmp.ne.s32.totalorder %s46, %s48
      %p52 = scmp.eq.s32.totalorder %s12, 0
      %p53 = por %p51, %p52
      %p54 = scmp.ne.s32.totalorder %s46, %s48
      %p55 = scmp.eq.s32.totalorder %s17, 1
      %p56 = por %p54, %p55
      %p57 = scmp.ne.s32.totalorder %s48, %s49
      %p58 = scmp.eq.s32.totalorder %s17, 0
      %p59 = por %p57, %p58
      %p60 = scmp.ne.s32.totalorder %s48, %s49
      %p61 = scmp.eq.s32.totalorder %s18, 1
      %p62 = por %p60, %p61
      %p64 = scmp.ne.s32.totalorder %s49, %s63
      %p65 = scmp.eq.s32.totalorder %s18, 0
      %p66 = por %p64, %p65
      %s68 = sadd.s32 %s67, 1
      %p71 = scmp.eq.s32.totalorder %s12, 1
      %p72 = scmp.ne.s32.totalorder %s67, %s69
      %p73 = scmp.eq.s32.totalorder %s12, 0
      %p74 = por %p72, %p73
      %p75 = scmp.ne.s32.totalorder %s67, %s69
      %p76 = scmp.eq.s32.totalorder %s17, 1
      %p77 = por %p75, %p76
      %p78 = scmp.ne.s32.totalorder %s69, %s70
      %p79 = scmp.eq.s32.totalorder %s17, 0
      %p80 = por %p78, %p79
      %p81 = scmp.ne.s32.totalorder %s69, %s70
      %p82 = scmp.eq.s32.totalorder %s18, 1
      %p83 = por %p81, %p82
      %p85 = scmp.ne.s32.totalorder %s70, %s84
      %p86 = scmp.eq.s32.totalorder %s18, 0
      %p87 = por %p85, %p86
      %s88 = ssub.s32 %s12, %s19
      %p89 = scmp.eq.s32.totalorder %s88, 0
      %s91 = sadd.s32 %s90, 1
      %s92 = scalar_select %p89, %s90, %s91
      %p95 = pneg %p89
      %p96 = scmp.eq.s32.totalorder %s12, 1
      %p97 = por %p95, %p96
      %p98 = scmp.ne.s32.totalorder %s90, %s93
      %p99 = scmp.eq.s32.totalorder %s12, 0
      %p100 = por %p98, %p99
      %p101 = scmp.ne.s32.totalorder %s90, %s93
      %p102 = scmp.eq.s32.totalorder %s17, 1
      %p103 = por %p101, %p102
      %p104 = scmp.ne.s32.totalorder %s93, %s94
      %p105 = scmp.eq.s32.totalorder %s17, 0
      %p106 = por %p104, %p105
      %p107 = scmp.ne.s32.totalorder %s93, %s94
      %p108 = scmp.eq.s32.totalorder %s18, 1
      %p109 = por %p107, %p108
      %p111 = scmp.ne.s32.totalorder %s94, %s110
      %p112 = scmp.eq.s32.totalorder %s18, 0
      %p113 = por %p111, %p112
      %p114 = scmp.le.s32.totalorder 1, %s12
      %p115 = scmp.lt.s32.totalorder %s12, 3
      %p116 = pnand %p114, %p115
      %p117 = pneg %p116
      // Predicated region
      $region9: #{tpu_custom_call.1} parent=5 // pred_check
        _
      $region10: #{tpu_custom_call.1} parent=5 // pred_check_branch
        %119 = sbr.rel (%p116) target = $region12
      $region11: #{tpu_custom_call.1} parent=5 // pred_region
        %s120 = ssub.s32 %s12, 1
        // Predicated region
        $region13: #{tpu_custom_call.1} parent=11 // pred_check
          %p121 = pneg %p59
        $region14: #{tpu_custom_call.1} parent=11 // pred_check_branch
          %123 = sbr.rel (%p121) target = $region16
        $region15: #{tpu_custom_call.1} parent=11 // pred_region
          _
        $region16: #{tpu_custom_call.1} parent=11 // pred_fallthru
          _
        // Predicated region
        $region17: #{tpu_custom_call.1} parent=11 // pred_check
          %p124 = pneg %p80
        $region18: #{tpu_custom_call.1} parent=11 // pred_check_branch
          %126 = sbr.rel (%p124) target = $region20
        $region19: #{tpu_custom_call.1} parent=11 // pred_region
          _
        $region20: #{tpu_custom_call.1} parent=11 // pred_fallthru
          _
      $region12: #{tpu_custom_call.1} parent=5 // pred_fallthru
        _
      %p127 = scmp.lt.s32.totalorder %s12, 2
      // Predicated region
      $region21: #{tpu_custom_call.1} parent=5 // pred_check
        %p128 = pneg %p127
      $region22: #{tpu_custom_call.1} parent=5 // pred_check_branch
        %130 = sbr.rel (%p128) target = $region24
      $region23: #{tpu_custom_call.1} parent=5 // pred_region
        // Predicated region
        $region25: #{tpu_custom_call.1} parent=23 // pred_check
          %p131 = pneg %p32
        $region26: #{tpu_custom_call.1} parent=23 // pred_check_branch
          %133 = sbr.rel (%p131) target = $region28
        $region27: #{tpu_custom_call.1} parent=23 // pred_region
          %s134 = smul.u32 32, %s12
          %p135 = scmp.lt.s32.totalorder %s134, 63
          %s136 = scalar_select %p135, %s134, 63
          %s137 = smul.addr %s136, 4
          %s138 = scalar_lea.vmem %s0, %s137
          %s139 = smul.u32 32, %s12
        $region28: #{tpu_custom_call.1} parent=23 // pred_fallthru
          _
      $region24: #{tpu_custom_call.1} parent=5 // pred_fallthru
        _
      %p140 = scmp.le.s32.totalorder 1, %s12
      %p141 = scmp.lt.s32.totalorder %s12, 3
      %p142 = pnand %p140, %p141
      %p143 = pneg %p142
      // Predicated region
      $region29: #{tpu_custom_call.1} parent=5 // pred_check
        _
      $region30: #{tpu_custom_call.1} parent=5 // pred_check_branch
        %145 = sbr.rel (%p142) target = $region32
      $region31: #{tpu_custom_call.1} parent=5 // pred_region
        %s146 = ssub.s32 %s12, 1
        %s147 = smul.u32 32, %s17
        %p148 = scmp.lt.s32.totalorder %s147, 63
        %s149 = scalar_select %p148, %s147, 63
        %s150 = smul.addr %s149, 4
        %s151 = scalar_lea.vmem %s0, %s150
        %p152 = pneg %p38
        %p153 = pneg %p35
        %p154 = pneg %p59
        %p155 = pneg %p56
        %p156 = pneg %p80
        %p157 = pneg %p77
        %p158 = pneg %p106
        %p159 = pneg %p103
        %s160 = sand.u32 %s93, 1
        %s161 = scalar_lea.sflag [#allocation3], %s160
        %s162 = sand.u32 %s93, 1
        %s163 = smul.addr %s162, 256
        %s164 = scalar_lea.vmem [#allocation2], %s163
        %s165 = smul.u32 32, %s17
        %p166 = scmp.lt.s32.totalorder %s165, 63
        %s167 = scalar_select %p166, %s165, 63
        %s168 = smul.addr %s167, 4
        %s169 = scalar_lea.vmem %s0, %s168
        %s170 = smul.u32 32, %s17
        %s171 = smul.u32 32, %s17
        %v173 = vld [vmem:[%s169] sm:$0xf]
        %v174 = vld [vmem:[%s169 + $0x4] sm:$0xf]
        %v175 = vld [vmem:[%s169 + $0x8] sm:$0xf]
        %v176 = vld [vmem:[%s169 + $0xc] sm:$0xf]
        %v177 = vld [vmem:[%s169 + $0x10] sm:$0xf]
        %v178 = vld [vmem:[%s169 + $0x14] sm:$0xf]
        %v179 = vld [vmem:[%s169 + $0x18] sm:$0xf]
        %v180 = vld [vmem:[%s169 + $0x1c] sm:$0xf]
        %v181 = vld [vmem:[%s169 + $0x20] sm:$0xf]
        %v182 = vld [vmem:[%s169 + $0x24] sm:$0xf]
        %v183 = vld [vmem:[%s169 + $0x28] sm:$0xf]
        %v184 = vld [vmem:[%s169 + $0x2c] sm:$0xf]
        %v185 = vld [vmem:[%s169 + $0x30] sm:$0xf]
        %v186 = vld [vmem:[%s169 + $0x34] sm:$0xf]
        %v187 = vld [vmem:[%s169 + $0x38] sm:$0xf]
        %v188 = vld [vmem:[%s169 + $0x3c] sm:$0xf]
        %v189 = vld [vmem:[%s169 + $0x40] sm:$0xf]
        %v190 = vld [vmem:[%s169 + $0x44] sm:$0xf]
        %v191 = vld [vmem:[%s169 + $0x48] sm:$0xf]
        %v192 = vld [vmem:[%s169 + $0x4c] sm:$0xf]
        %v193 = vld [vmem:[%s169 + $0x50] sm:$0xf]
        %v194 = vld [vmem:[%s169 + $0x54] sm:$0xf]
        %v195 = vld [vmem:[%s169 + $0x58] sm:$0xf]
        %v196 = vld [vmem:[%s169 + $0x5c] sm:$0xf]
        %v197 = vld [vmem:[%s169 + $0x60] sm:$0xf]
        %v198 = vld [vmem:[%s169 + $0x64] sm:$0xf]
        %v199 = vld [vmem:[%s169 + $0x68] sm:$0xf]
        %v200 = vld [vmem:[%s169 + $0x6c] sm:$0xf]
        %v201 = vld [vmem:[%s169 + $0x70] sm:$0xf]
        %v202 = vld [vmem:[%s169 + $0x74] sm:$0xf]
        %v203 = vld [vmem:[%s169 + $0x78] sm:$0xf]
        %v204 = vld [vmem:[%s169 + $0x7c] sm:$0xf]
        %v205 = vld [vmem:[%s1] sm:$0xf]
        %v206 = vld [vmem:[%s1 + $0x4] sm:$0xf]
        %v207 = vld [vmem:[%s1 + $0x8] sm:$0xf]
        %v208 = vld [vmem:[%s1 + $0xc] sm:$0xf]
        %v209 = vld [vmem:[%s2] sm:$0x1]
        %v211 = vperm.slane %v209, 0
        %v245 = vunpack.c.l.b16 %v173
        %v246 = vunpack.c.l.b16 %v174
        %v247 = vunpack.c.l.b16 %v175
        %v248 = vunpack.c.l.b16 %v176
        %v249 = vunpack.c.l.b16 %v177
        %v250 = vunpack.c.l.b16 %v178
        %v251 = vunpack.c.l.b16 %v179
        %v252 = vunpack.c.l.b16 %v180
        %v253 = vunpack.c.l.b16 %v181
        %v254 = vunpack.c.l.b16 %v182
        %v255 = vunpack.c.l.b16 %v183
        %v256 = vunpack.c.l.b16 %v184
        %v257 = vunpack.c.l.b16 %v185
        %v258 = vunpack.c.l.b16 %v186
        %v259 = vunpack.c.l.b16 %v187
        %v260 = vunpack.c.l.b16 %v188
        %v261 = vunpack.c.l.b16 %v189
        %v262 = vunpack.c.l.b16 %v190
        %v263 = vunpack.c.l.b16 %v191
        %v264 = vunpack.c.l.b16 %v192
        %v265 = vunpack.c.l.b16 %v193
        %v266 = vunpack.c.l.b16 %v194
        %v267 = vunpack.c.l.b16 %v195
        %v268 = vunpack.c.l.b16 %v196
        %v269 = vunpack.c.l.b16 %v197
        %v270 = vunpack.c.l.b16 %v198
        %v271 = vunpack.c.l.b16 %v199
        %v272 = vunpack.c.l.b16 %v200
        %v273 = vunpack.c.l.b16 %v201
        %v274 = vunpack.c.l.b16 %v202
        %v275 = vunpack.c.l.b16 %v203
        %v276 = vunpack.c.l.b16 %v204
        %v277 = vpack.c.b16 %v246, %v245
        %v278 = vpack.c.b16 %v248, %v247
        %v279 = vpack.c.b16 %v250, %v249
        %v280 = vpack.c.b16 %v252, %v251
        %v281 = vpack.c.b16 %v254, %v253
        %v282 = vpack.c.b16 %v256, %v255
        %v283 = vpack.c.b16 %v258, %v257
        %v284 = vpack.c.b16 %v260, %v259
        %v285 = vpack.c.b16 %v262, %v261
        %v286 = vpack.c.b16 %v264, %v263
        %v287 = vpack.c.b16 %v266, %v265
        %v288 = vpack.c.b16 %v268, %v267
        %v289 = vpack.c.b16 %v270, %v269
        %v290 = vpack.c.b16 %v272, %v271
        %v291 = vpack.c.b16 %v274, %v273
        %v292 = vpack.c.b16 %v276, %v275
        %v297 = vunpack.c.l.b16 %v205
        %v298 = vunpack.c.l.b16 %v206
        %v299 = vunpack.c.l.b16 %v207
        %v300 = vunpack.c.l.b16 %v208
        %v301 = vpack.c.b16 %v298, %v297
        %v302 = vpack.c.b16 %v300, %v299
        %vm305 = vcmask 261120
        %v307 = vsel %vm305, %v277, 0
        %v310 = vsel %vm305, %v278, 0
        %v313 = vsel %vm305, %v279, 0
        %v316 = vsel %vm305, %v280, 0
        %v319 = vsel %vm305, %v281, 0
        %v322 = vsel %vm305, %v282, 0
        %v325 = vsel %vm305, %v283, 0
        %v328 = vsel %vm305, %v284, 0
        %v331 = vsel %vm305, %v285, 0
        %v334 = vsel %vm305, %v286, 0
        %v337 = vsel %vm305, %v287, 0
        %v340 = vsel %vm305, %v288, 0
        %v343 = vsel %vm305, %v289, 0
        %v346 = vsel %vm305, %v290, 0
        %v349 = vsel %vm305, %v291, 0
        %v352 = vsel %vm305, %v292, 0
        %354 = vmatpush.bf16.msra.mxu0 0
        %355 = vmatpush.bf16.msra.mxu0 0
        %356 = vmatpush.bf16.msra.mxu0 0
        %357 = vmatpush.bf16.msra.mxu0 0
        %358 = vmatpush.bf16.msra.mxu0 0
        %359 = vmatpush.bf16.msra.mxu0 0
        %360 = vmatpush.bf16.msra.mxu0 %v302
        %361 = vmatpush.bf16.msra.mxu0 %v301
        %362 = vmatmul.bf16.gmra.mxu0 %v307
        %v363 = vpop.f32.mrf.mxu0
        %v364 = vadd.f32 %v211, %v363
        %v365 = vpop.f32.mrf.mxu0
        %v366 = vadd.f32 %v211, %v365
        %367 = vmatmul.bf16.gmra.mxu0 %v310
        %v368 = vpop.f32.mrf.mxu0
        %v369 = vadd.f32 %v211, %v368
        %v370 = vpop.f32.mrf.mxu0
        %v371 = vadd.f32 %v211, %v370
        %372 = vmatmul.bf16.gmra.mxu0 %v313
        %v373 = vpop.f32.mrf.mxu0
        %v374 = vadd.f32 %v211, %v373
        %v375 = vpop.f32.mrf.mxu0
        %v376 = vadd.f32 %v211, %v375
        %377 = vmatmul.bf16.gmra.mxu0 %v316
        %v378 = vpop.f32.mrf.mxu0
        %v379 = vadd.f32 %v211, %v378
        %v380 = vpop.f32.mrf.mxu0
        %v381 = vadd.f32 %v211, %v380
        %382 = vmatmul.bf16.gmra.mxu0 %v319
        %v383 = vpop.f32.mrf.mxu0
        %v384 = vadd.f32 %v211, %v383
        %v385 = vpop.f32.mrf.mxu0
        %v386 = vadd.f32 %v211, %v385
        %387 = vmatmul.bf16.gmra.mxu0 %v322
        %v388 = vpop.f32.mrf.mxu0
        %v389 = vadd.f32 %v211, %v388
        %v390 = vpop.f32.mrf.mxu0
        %v391 = vadd.f32 %v211, %v390
        %392 = vmatmul.bf16.gmra.mxu0 %v325
        %v393 = vpop.f32.mrf.mxu0
        %v394 = vadd.f32 %v211, %v393
        %v395 = vpop.f32.mrf.mxu0
        %v396 = vadd.f32 %v211, %v395
        %397 = vmatmul.bf16.gmra.mxu0 %v328
        %v398 = vpop.f32.mrf.mxu0
        %v399 = vadd.f32 %v211, %v398
        %v400 = vpop.f32.mrf.mxu0
        %v401 = vadd.f32 %v211, %v400
        %402 = vmatmul.bf16.gmra.mxu0 %v331
        %v403 = vpop.f32.mrf.mxu0
        %v404 = vadd.f32 %v211, %v403
        %v405 = vpop.f32.mrf.mxu0
        %v406 = vadd.f32 %v211, %v405
        %407 = vmatmul.bf16.gmra.mxu0 %v334
        %v408 = vpop.f32.mrf.mxu0
        %v409 = vadd.f32 %v211, %v408
        %v410 = vpop.f32.mrf.mxu0
        %v411 = vadd.f32 %v211, %v410
        %412 = vmatmul.bf16.gmra.mxu0 %v337
        %v413 = vpop.f32.mrf.mxu0
        %v414 = vadd.f32 %v211, %v413
        %v415 = vpop.f32.mrf.mxu0
        %v416 = vadd.f32 %v211, %v415
        %417 = vmatmul.bf16.gmra.mxu0 %v340
        %v418 = vpop.f32.mrf.mxu0
        %v419 = vadd.f32 %v211, %v418
        %v420 = vpop.f32.mrf.mxu0
        %v421 = vadd.f32 %v211, %v420
        %422 = vmatmul.bf16.gmra.mxu0 %v343
        %v423 = vpop.f32.mrf.mxu0
        %v424 = vadd.f32 %v211, %v423
        %v425 = vpop.f32.mrf.mxu0
        %v426 = vadd.f32 %v211, %v425
        %427 = vmatmul.bf16.gmra.mxu0 %v346
        %v428 = vpop.f32.mrf.mxu0
        %v429 = vadd.f32 %v211, %v428
        %v430 = vpop.f32.mrf.mxu0
        %v431 = vadd.f32 %v211, %v430
        %432 = vmatmul.bf16.gmra.mxu0 %v349
        %v433 = vpop.f32.mrf.mxu0
        %v434 = vadd.f32 %v211, %v433
        %v435 = vpop.f32.mrf.mxu0
        %v436 = vadd.f32 %v211, %v435
        %437 = vmatmul.bf16.gmra.mxu0 %v352
        %v438 = vpop.f32.mrf.mxu0
        %v439 = vadd.f32 %v211, %v438
        %v440 = vpop.f32.mrf.mxu0
        %v441 = vadd.f32 %v211, %v440
        %442 = vdwg.mxu0
        %443 = vst [vmem:[%s164] sm:$0xff] %v364
        %444 = vst [vmem:[%s164 + $0x8] sm:$0xff] %v366
        %445 = vst [vmem:[%s164 + $0x10] sm:$0xff] %v369
        %446 = vst [vmem:[%s164 + $0x18] sm:$0xff] %v371
        %447 = vst [vmem:[%s164 + $0x20] sm:$0xff] %v374
        %448 = vst [vmem:[%s164 + $0x28] sm:$0xff] %v376
        %449 = vst [vmem:[%s164 + $0x30] sm:$0xff] %v379
        %450 = vst [vmem:[%s164 + $0x38] sm:$0xff] %v381
        %451 = vst [vmem:[%s164 + $0x40] sm:$0xff] %v384
        %452 = vst [vmem:[%s164 + $0x48] sm:$0xff] %v386
        %453 = vst [vmem:[%s164 + $0x50] sm:$0xff] %v389
        %454 = vst [vmem:[%s164 + $0x58] sm:$0xff] %v391
        %455 = vst [vmem:[%s164 + $0x60] sm:$0xff] %v394
        %456 = vst [vmem:[%s164 + $0x68] sm:$0xff] %v396
        %457 = vst [vmem:[%s164 + $0x70] sm:$0xff] %v399
        %458 = vst [vmem:[%s164 + $0x78] sm:$0xff] %v401
        %459 = vst [vmem:[%s164 + $0x80] sm:$0xff] %v404
        %460 = vst [vmem:[%s164 + $0x88] sm:$0xff] %v406
        %461 = vst [vmem:[%s164 + $0x90] sm:$0xff] %v409
        %462 = vst [vmem:[%s164 + $0x98] sm:$0xff] %v411
        %463 = vst [vmem:[%s164 + $0xa0] sm:$0xff] %v414
        %464 = vst [vmem:[%s164 + $0xa8] sm:$0xff] %v416
        %465 = vst [vmem:[%s164 + $0xb0] sm:$0xff] %v419
        %466 = vst [vmem:[%s164 + $0xb8] sm:$0xff] %v421
        %467 = vst [vmem:[%s164 + $0xc0] sm:$0xff] %v424
        %468 = vst [vmem:[%s164 + $0xc8] sm:$0xff] %v426
        %469 = vst [vmem:[%s164 + $0xd0] sm:$0xff] %v429
        %470 = vst [vmem:[%s164 + $0xd8] sm:$0xff] %v431
        %471 = vst [vmem:[%s164 + $0xe0] sm:$0xff] %v434
        %472 = vst [vmem:[%s164 + $0xe8] sm:$0xff] %v436
        %473 = vst [vmem:[%s164 + $0xf0] sm:$0xff] %v439
        %474 = vst [vmem:[%s164 + $0xf8] sm:$0xff] %v441
        %s475 = sand.u32 %s93, 1
        %s476 = scalar_lea.sflag [#allocation3], %s475
        %s477 = sand.u32 %s93, 1
        %s478 = smul.addr %s477, 256
        %s479 = scalar_lea.vmem [#allocation2], %s478
        // Predicated region
        $region33: #{tpu_custom_call.1} parent=31 // pred_check
          %p480 = pneg %p103
        $region34: #{tpu_custom_call.1} parent=31 // pred_check_branch
          %482 = sbr.rel (%p480) target = $region36
        $region35: #{tpu_custom_call.1} parent=31 // pred_region
          %s483 = smul.u32 32, %s17
          %485 = vsyncadd %s476, 0
          %s486 = smul.addr %s483, 8
          %s487 = scalar_lea.hbm %s3, %s486
          %s488 = sshll.u32 %s479, 4
          %s489 = int_to_ptr.vmem [resolvable:$true] %s488
          %s490 = sshll.u32 %s487, 4
          %s491 = int_to_ptr.hbm [resolvable:$true] %s490
          %496 = dma.vmem_to_hbm [thread:$0]  %s489, 4096, %s491, %s476, 128, 128, 8
        $region36: #{tpu_custom_call.1} parent=31 // pred_fallthru
          _
      $region32: #{tpu_custom_call.1} parent=5 // pred_fallthru
        _
      %p497 = scmp.le.s32.totalorder 2, %s12
      // Predicated region
      $region37: #{tpu_custom_call.1} parent=5 // pred_check
        %p498 = pneg %p497
      $region38: #{tpu_custom_call.1} parent=5 // pred_check_branch
        %500 = sbr.rel (%p498) target = $region40
      $region39: #{tpu_custom_call.1} parent=5 // pred_region
        %s501 = ssub.s32 %s12, 2
        // Predicated region
        $region41: #{tpu_custom_call.1} parent=39 // pred_check
          %p502 = pneg %p109
        $region42: #{tpu_custom_call.1} parent=39 // pred_check_branch
          %504 = sbr.rel (%p502) target = $region44
        $region43: #{tpu_custom_call.1} parent=39 // pred_region
          %s505 = sand.u32 %s94, 1
          %s506 = scalar_lea.sflag [#allocation3], %s505
          %s507 = sand.u32 %s94, 1
          %s508 = smul.addr %s507, 256
          %s509 = scalar_lea.vmem [#allocation2], %s508
          %511 = dma.done %s506, 4096
        $region44: #{tpu_custom_call.1} parent=39 // pred_fallthru
          _
      $region40: #{tpu_custom_call.1} parent=5 // pred_fallthru
        _
    $region6: #{tpu_custom_call.1} parent=1 // loop_footer
      %s16 = sadd.s32 1, %s12
    $region7: #{tpu_custom_call.1} parent=1 // loop_footer_branch
      %11 = sbr.rel target = $region3
    $region8: #{tpu_custom_call.1} parent=1 // loop_exit
      _
    %512 = vsyncpa [#allocation3], 1
    %s513 = scalar_lea.sflag [#allocation3], 1
    %514 = vsyncpa %s513, 1

</llo_original>
